<compile_context>
chip_gen: v7x
topology: tpu7x:2x2x1
jax: 0.10.0
libtpu: 0.0.40
codegen_flags: <defaults>
</compile_context>

<pallas_src>
import numpy as np
import jax
import jax.numpy as jnp
from jax import lax
from jax.experimental import pallas as pl
from jax.experimental.pallas import tpu as pltpu


def grid_8_neighbour_graph(N: int) -> np.ndarray:
    """Adjacency matrix of an N x N grid where each node has up to 8 neighbours."""
    n = N ** 2
    dx = [-1, 0, 1, -1, 1, -1, 0, 1]
    dy = [-1, -1, -1, 0, 0, 1, 1, 1]
    A = np.zeros((n, n), dtype=np.float32)
    for x in range(N):
        for y in range(N):
            idx = x * N + y
            for i in range(len(dx)):
                nx_, ny_ = x + dx[i], y + dy[i]
                if 0 <= nx_ < N and 0 <= ny_ < N:
                    A[idx, nx_ * N + ny_] = 1.0
    return A


def _round_up(v: int, m: int) -> int:
    return ((v + m - 1) // m) * m


# ----------------------------------------------------------------------------
# One-time operand preparation (hoist pad / transpose / cast out of any solver
# loop).  Padded rows/cols are exactly zero, so real entries are unaffected.
# ----------------------------------------------------------------------------
def prepare_params(A, W, b, *, use_bf16: bool = True):
    n = A.shape[0]
    hidden = W.shape[0]
    NP = _round_up(n, 128)        # node dim (M of 1st matmul and its K)
    HP = _round_up(hidden, 128)   # hidden / lane dim
    cdt = jnp.bfloat16 if use_bf16 else jnp.float32
    A_p = jnp.pad(A, ((0, NP - n), (0, NP - n))).astype(cdt)        # 0/1: lossless
    wt_p = jnp.pad(W.T, ((0, HP - hidden), (0, HP - hidden))).astype(cdt)
    b_p = jnp.pad(b.reshape(1, -1), ((0, 0), (0, HP - hidden))).astype(jnp.float32)
    return A_p, wt_p, b_p, NP, HP


def pad_state(x, NP: int, HP: int):
    n, hidden = x.shape
    return jnp.pad(x, ((0, NP - n), (0, HP - hidden))).astype(jnp.float32)


def _vmem_limit_bytes(*operands, out_elems: int, out_itemsize: int = 4) -> int:
    total = sum(int(np.prod(o.shape)) * o.dtype.itemsize for o in operands)
    total += out_elems * out_itemsize
    # Generous headroom for compiler scratch; clamp to v7x's 64 MiB physical VMEM.
    return int(min(64 << 20, max(2 * total + (8 << 20), 16 << 20)))


# ----------------------------------------------------------------------------
# Single RHS evaluation (exactly ODEFunc.forward).
# ----------------------------------------------------------------------------
def make_forward_kernel(compute_dtype):
    def kernel(a_ref, x_ref, wt_ref, b_ref, o_ref):
        # h = A @ x                         (NP, HP), f32 accumulation on MXU
        h = jnp.dot(a_ref[...], x_ref[...].astype(compute_dtype),
                    preferred_element_type=jnp.float32)
        # dropout(p=0.0) is the identity.
        # z = h @ W^T + b   (W^T supplied pre-transposed, pre-cast)
        z = jnp.dot(h.astype(compute_dtype), wt_ref[...],
                    preferred_element_type=jnp.float32) + b_ref[...]
        o_ref[...] = jnp.tanh(z).astype(o_ref.dtype)
    return kernel


def odefunc_forward_prepared(A_p, x_p, wt_p, b_p, NP: int, HP: int,
                             *, compute_dtype=jnp.bfloat16):
    return pl.pallas_call(
        make_forward_kernel(compute_dtype),
        out_shape=jax.ShapeDtypeStruct((NP, HP), jnp.float32),
        in_specs=[
            pl.BlockSpec((NP, NP), lambda: (0, 0)),   # A
            pl.BlockSpec((NP, HP), lambda: (0, 0)),   # x
            pl.BlockSpec((HP, HP), lambda: (0, 0)),   # W^T
            pl.BlockSpec((1, HP), lambda: (0, 0)),    # bias
        ],
        out_specs=pl.BlockSpec((NP, HP), lambda: (0, 0)),
        compiler_params=pltpu.CompilerParams(
            vmem_limit_bytes=_vmem_limit_bytes(A_p, x_p, wt_p, b_p,
                                               out_elems=NP * HP)),
    )(A_p, x_p, wt_p, b_p)


def odefunc_forward(A, x, W, b, *, use_bf16: bool = True):
    """Convenience wrapper: pads once and evaluates a single RHS."""
    n, hidden = x.shape
    A_p, wt_p, b_p, NP, HP = prepare_params(A, W, b, use_bf16=use_bf16)
    x_p = pad_state(x, NP, HP)
    cdt = jnp.bfloat16 if use_bf16 else jnp.float32
    out_p = odefunc_forward_prepared(A_p, x_p, wt_p, b_p, NP, HP, compute_dtype=cdt)
    return out_p[:n, :hidden]


# ----------------------------------------------------------------------------
# Fused multi-step explicit-Euler integration: the ENTIRE time loop runs inside
# one kernel invocation (no grid), with A, W^T, b VMEM-resident and the state
# carried as a fori_loop value (vregs / compiler-managed VMEM).
# ----------------------------------------------------------------------------
def make_euler_kernel(dt: float, num_steps: int, NP: int, HP: int,
                      compute_dtype, unroll):
    def kernel(a_ref, x0_ref, wt_ref, b_ref, o_ref):
        a = a_ref[...]
        wt = wt_ref[...]
        # Hoist the bias broadcast out of the time loop (no CSE of broadcasts).
        bias = jnp.broadcast_to(b_ref[...], (NP, HP)).astype(jnp.float32)

        def body(_, x):
            h = jnp.dot(a, x.astype(compute_dtype),
                        preferred_element_type=jnp.float32)
            z = jnp.dot(h.astype(compute_dtype), wt,
                        preferred_element_type=jnp.float32) + bias
            # Elementwise update stays f32 (v5e has no bf16 VPU).
            return x + dt * jnp.tanh(z)

        x_final = lax.fori_loop(0, num_steps, body, x0_ref[...], unroll=unroll)
        o_ref[...] = x_final.astype(o_ref.dtype)

    return kernel


def odefunc_integrate_euler(A, x0, W, b, num_steps: int, dt: float,
                            *, use_bf16: bool = True, unroll=None):
    n, hidden = x0.shape
    A_p, wt_p, b_p, NP, HP = prepare_params(A, W, b, use_bf16=use_bf16)
    x_p = pad_state(x0, NP, HP)
    cdt = jnp.bfloat16 if use_bf16 else jnp.float32
    if unroll is None:
        unroll = num_steps <= 16   # fully unroll short fixed trip-counts

    out_p = pl.pallas_call(
        make_euler_kernel(float(dt), int(num_steps), NP, HP, cdt, unroll),
        out_shape=jax.ShapeDtypeStruct((NP, HP), jnp.float32),
        in_specs=[
            pl.BlockSpec((NP, NP), lambda: (0, 0)),   # A      : VMEM-resident
            pl.BlockSpec((NP, HP), lambda: (0, 0)),   # x0     : VMEM-resident
            pl.BlockSpec((HP, HP), lambda: (0, 0)),   # W^T    : VMEM-resident
            pl.BlockSpec((1, HP), lambda: (0, 0)),    # bias   : VMEM-resident
        ],
        out_specs=pl.BlockSpec((NP, HP), lambda: (0, 0)),
        compiler_params=pltpu.CompilerParams(
            vmem_limit_bytes=_vmem_limit_bytes(A_p, x_p, wt_p, b_p,
                                               out_elems=NP * HP)),
    )(A_p, x_p, wt_p, b_p)
    return out_p[:n, :hidden]


# ----------------------------------------------------------------------------
# Pure-JAX references.
# ----------------------------------------------------------------------------
def odefunc_reference(A, x, W, b):
    return jnp.tanh((A @ x) @ W.T + b[None, :])


def euler_reference(A, x, W, b, num_steps, dt):
    for _ in range(num_steps):
        x = x + dt * odefunc_reference(A, x, W, b)
    return x


if __name__ == "__main__":
    # Small, self-consistent shapes: N=8 grid -> n=64 nodes, hidden_size=20.
    N = 8
    n = N ** 2
    hidden_size = 20

    A = jnp.asarray(grid_8_neighbour_graph(N), dtype=jnp.float32)

    key = jax.random.PRNGKey(0)
    kx, kw, kb = jax.random.split(key, 3)
    x = jax.random.normal(kx, (n, hidden_size), dtype=jnp.float32)

    # Deterministic nn.Linear-style init: U(-1/sqrt(fan_in), 1/sqrt(fan_in)).
    bound = 1.0 / np.sqrt(hidden_size)
    W = jax.random.uniform(kw, (hidden_size, hidden_size), jnp.float32, -bound, bound)
    b = jax.random.uniform(kb, (hidden_size,), jnp.float32, -bound, bound)

    ref = odefunc_reference(A, x, W, b)

    # 1) Single RHS evaluation, exact f32 path — matches ODEFunc.forward.
    out_f32 = jax.block_until_ready(odefunc_forward(A, x, W, b, use_bf16=False))
    np.testing.assert_allclose(np.asarray(out_f32), np.asarray(ref),
                               rtol=1e-5, atol=1e-5)

    # 2) Single RHS evaluation, bf16-MXU path (f32 accumulation).
    out_bf16 = jax.block_until_ready(odefunc_forward(A, x, W, b, use_bf16=True))
    np.testing.assert_allclose(np.asarray(out_bf16), np.asarray(ref),
                               rtol=5e-2, atol=5e-2)

    # 3) Fused multi-step Euler integration — whole time loop in one kernel.
    num_steps, dt = 8, 0.05
    ref_T = euler_reference(A, x, W, b, num_steps, dt)

    out_T_f32 = jax.block_until_ready(
        odefunc_integrate_euler(A, x, W, b, num_steps, dt, use_bf16=False))
    np.testing.assert_allclose(np.asarray(out_T_f32), np.asarray(ref_T),
                               rtol=1e-4, atol=1e-4)

    out_T_bf16 = jax.block_until_ready(
        odefunc_integrate_euler(A, x, W, b, num_steps, dt, use_bf16=True))
    np.testing.assert_allclose(np.asarray(out_T_bf16), np.asarray(ref_T),
                               rtol=5e-2, atol=5e-2)

    print("KERNEL_OK")
</pallas_src>

<mosaic_0001>
module attributes {stable_mosaic.version = 11 : i64} {
  func.func @kernel(%arg0: memref<128x128xf32, #tpu.memory_space<vmem>>, %arg1: memref<128x128xf32, #tpu.memory_space<vmem>>, %arg2: memref<128x128xf32, #tpu.memory_space<vmem>>, %arg3: memref<1x128xf32, #tpu.memory_space<vmem>>, %arg4: memref<128x128xf32, #tpu.memory_space<vmem>>) attributes {dimension_semantics = [], scalar_prefetch = 0 : i64, scratch_operands = 0 : i64, tpu.core_type = #tpu.core_type<tc>} {
    %c0 = arith.constant 0 : index
    %c0_0 = arith.constant 0 : index
    %0 = vector.load %arg0[%c0, %c0_0] : memref<128x128xf32, #tpu.memory_space<vmem>>, vector<128x128xf32>
    %c0_1 = arith.constant 0 : index
    %c0_2 = arith.constant 0 : index
    %1 = vector.load %arg1[%c0_1, %c0_2] : memref<128x128xf32, #tpu.memory_space<vmem>>, vector<128x128xf32>
    %cst = arith.constant dense<0.000000e+00> : vector<128x128xf32>
    %2 = tpu.matmul %0, %1, %cst {dimension_numbers = #tpu.dot_dimension_numbers<[1], [0], [0], [1], [0, 0, 1, 1], [], []>} : vector<128x128xf32>, vector<128x128xf32>, vector<128x128xf32> -> vector<128x128xf32>
    %c0_3 = arith.constant 0 : index
    %c0_4 = arith.constant 0 : index
    %3 = vector.load %arg2[%c0_3, %c0_4] : memref<128x128xf32, #tpu.memory_space<vmem>>, vector<128x128xf32>
    %cst_5 = arith.constant dense<0.000000e+00> : vector<128x128xf32>
    %4 = tpu.matmul %2, %3, %cst_5 {dimension_numbers = #tpu.dot_dimension_numbers<[1], [0], [0], [1], [0, 0, 1, 1], [], []>} : vector<128x128xf32>, vector<128x128xf32>, vector<128x128xf32> -> vector<128x128xf32>
    %c0_6 = arith.constant 0 : index
    %c0_7 = arith.constant 0 : index
    %5 = vector.load %arg3[%c0_6, %c0_7] : memref<1x128xf32, #tpu.memory_space<vmem>>, vector<1x128xf32>
    %6 = vector.broadcast %5 : vector<1x128xf32> to vector<128x128xf32>
    %7 = arith.addf %4, %6 : vector<128x128xf32>
    %8 = math.tanh %7 : vector<128x128xf32>
    %c0_8 = arith.constant 0 : index
    %c0_9 = arith.constant 0 : index
    %9 = vector.load %arg4[%c0_8, %c0_9] : memref<128x128xf32, #tpu.memory_space<vmem>>, vector<128x128xf32>
    tpu.vector_store %arg4[%c0_8, %c0_9], %8 {strides = array<i32>} : memref<128x128xf32, #tpu.memory_space<vmem>>, vector<128x128xf32>,
    return
  }
}

</mosaic_0001>

<llo_original>
// kernel: tpu_custom_call.1
$region0: #{tpu_custom_call.1}
  #allocation0 [shape = 'u32[]', space=smem, size = 0x4, offset = 0x4, fixed_abs, tag = 'smem constant byte address 0x4 - core index']
  #allocation1 [shape = 'u32[144,128]{1,0:T(1,128)}', space=vmem, size = 0x12000, scoped, tag = 'internal scratch']
  %s0 = inlined_call_operand.hbm [shape: f32[128,128], index: 0, kind: input, shape index: {}]
  %s1 = inlined_call_operand.hbm [shape: f32[128,128], index: 1, kind: input, shape index: {}]
  %s2 = inlined_call_operand.hbm [shape: f32[128,128], index: 2, kind: input, shape index: {}]
  %s3 = inlined_call_operand.vmem [shape: f32[1,128], index: 3, kind: input, shape index: {}]
  %s4 = inlined_call_operand.hbm [shape: f32[128,128], index: 4, kind: output, shape index: {}]
  %s5 = sld [smem:[#allocation0]]
  $region38: #{tpu_custom_call.1} parent=0
    _
  %s7 = ssub.s32 1, %s5
  %s8 = scalar_select 0, %s7, %s5
  $region1: #{tpu_custom_call.1} parent=0
    #allocation2 [shape = 'u8[65536]{0}', space=vmem, size = 0x10000, scoped, tag = 'input window, operand 0, single buffered']
    #allocation3 [shape = 's32[1]{0}', space=sflag, size = 0x4, scoped, tag = 'scoped memory for tpu_custom_call.1']
    #allocation4 [shape = 's32[1]{0}', space=sflag, size = 0x4, scoped, tag = 'scoped memory for tpu_custom_call.1']
    #allocation5 [shape = 'u8[65536]{0}', space=vmem, size = 0x10000, scoped, tag = 'input window, operand 1, single buffered']
    #allocation6 [shape = 's32[1]{0}', space=sflag, size = 0x4, scoped, tag = 'scoped memory for tpu_custom_call.1']
    #allocation7 [shape = 'u8[65536]{0}', space=vmem, size = 0x10000, scoped, tag = 'input window, operand 2, single buffered']
    #allocation8 [shape = 'u8[65536]{0}', space=vmem, size = 0x10000, scoped, tag = 'output window, operand 0, single buffered']
    %9 = vsyncpa [#allocation3], 0
    %10 = vsyncpa [#allocation6], 0
    %11 = vsyncpa [#allocation4], 0
    // Predicated region
    $region2: #{tpu_custom_call.1} parent=1 // pred_check
      _
    $region3: #{tpu_custom_call.1} parent=1 // pred_check_branch
      %13 = sbr.rel (0) target = $region5
    $region4: #{tpu_custom_call.1} parent=1 // pred_region
      %s15 = ssub.s32 2048, 2048
      %16 = vsyncadd [#allocation3], %s15
      %s17 = sshll.u32 [#allocation2], 4
      %s18 = int_to_ptr.vmem [resolvable:$true] %s17
      %23 = dma.hbm_to_vmem [thread:$0]  %s0, 2048, %s18, [#allocation3], 128, 128, 8
    $region5: #{tpu_custom_call.1} parent=1 // pred_fallthru
      _
    // Predicated region
    $region6: #{tpu_custom_call.1} parent=1 // pred_check
      _
    $region7: #{tpu_custom_call.1} parent=1 // pred_check_branch
      %25 = sbr.rel (0) target = $region9
    $region8: #{tpu_custom_call.1} parent=1 // pred_region
      %s27 = ssub.s32 2048, 2048
      %28 = vsyncadd [#allocation6], %s27
      %s29 = sshll.u32 [#allocation5], 4
      %s30 = int_to_ptr.vmem [resolvable:$true] %s29
      %35 = dma.hbm_to_vmem [thread:$0]  %s1, 2048, %s30, [#allocation6], 128, 128, 8
    $region9: #{tpu_custom_call.1} parent=1 // pred_fallthru
      _
    // Predicated region
    $region10: #{tpu_custom_call.1} parent=1 // pred_check
      _
    $region11: #{tpu_custom_call.1} parent=1 // pred_check_branch
      %37 = sbr.rel (0) target = $region13
    $region12: #{tpu_custom_call.1} parent=1 // pred_region
      %s39 = ssub.s32 2048, 2048
      %40 = vsyncadd [#allocation6], %s39
      %s41 = sshll.u32 [#allocation7], 4
      %s42 = int_to_ptr.vmem [resolvable:$true] %s41
      %47 = dma.hbm_to_vmem [thread:$0]  %s2, 2048, %s42, [#allocation6], 128, 128, 8
    $region13: #{tpu_custom_call.1} parent=1 // pred_fallthru
      _
    // Predicated region
    $region14: #{tpu_custom_call.1} parent=1 // pred_check
      _
    $region15: #{tpu_custom_call.1} parent=1 // pred_check_branch
      %49 = sbr.rel (0) target = $region17
    $region16: #{tpu_custom_call.1} parent=1 // pred_region
      _
    $region17: #{tpu_custom_call.1} parent=1 // pred_fallthru
      _
    // Predicated region
    $region18: #{tpu_custom_call.1} parent=1 // pred_check
      _
    $region19: #{tpu_custom_call.1} parent=1 // pred_check_branch
      %51 = sbr.rel (0) target = $region21
    $region20: #{tpu_custom_call.1} parent=1 // pred_region
      %52 = dma.done [#allocation3], 2048
    $region21: #{tpu_custom_call.1} parent=1 // pred_fallthru
      _
    // Predicated region
    $region22: #{tpu_custom_call.1} parent=1 // pred_check
      _
    $region23: #{tpu_custom_call.1} parent=1 // pred_check_branch
      %54 = sbr.rel (0) target = $region25
    $region24: #{tpu_custom_call.1} parent=1 // pred_region
      %55 = dma.done [#allocation6], 2048
    $region25: #{tpu_custom_call.1} parent=1 // pred_fallthru
      _
    // Predicated region
    $region26: #{tpu_custom_call.1} parent=1 // pred_check
      _
    $region27: #{tpu_custom_call.1} parent=1 // pred_check_branch
      %57 = sbr.rel (0) target = $region29
    $region28: #{tpu_custom_call.1} parent=1 // pred_region
      %58 = dma.done [#allocation6], 2048
    $region29: #{tpu_custom_call.1} parent=1 // pred_fallthru
      _
    %v59 = vld [vmem:[#allocation2] sm:$0xff]
    %v60 = vld [vmem:[#allocation2 + $0x8] sm:$0xff]
    %v61 = vld [vmem:[#allocation2 + $0x10] sm:$0xff]
    %v62 = vld [vmem:[#allocation2 + $0x18] sm:$0xff]
    %v63 = vld [vmem:[#allocation2 + $0x20] sm:$0xff]
    %v64 = vld [vmem:[#allocation2 + $0x28] sm:$0xff]
    %v65 = vld [vmem:[#allocation2 + $0x30] sm:$0xff]
    %v66 = vld [vmem:[#allocation2 + $0x38] sm:$0xff]
    %v67 = vld [vmem:[#allocation2 + $0x40] sm:$0xff]
    %v68 = vld [vmem:[#allocation2 + $0x48] sm:$0xff]
    %v69 = vld [vmem:[#allocation2 + $0x50] sm:$0xff]
    %v70 = vld [vmem:[#allocation2 + $0x58] sm:$0xff]
    %v71 = vld [vmem:[#allocation2 + $0x60] sm:$0xff]
    %v72 = vld [vmem:[#allocation2 + $0x68] sm:$0xff]
    %v73 = vld [vmem:[#allocation2 + $0x70] sm:$0xff]
    %v74 = vld [vmem:[#allocation2 + $0x78] sm:$0xff]
    %v75 = vld [vmem:[#allocation5] sm:$0xff]
    %v76 = vld [vmem:[#allocation5 + $0x8] sm:$0xff]
    %v77 = vld [vmem:[#allocation5 + $0x10] sm:$0xff]
    %v78 = vld [vmem:[#allocation5 + $0x18] sm:$0xff]
    %v79 = vld [vmem:[#allocation5 + $0x20] sm:$0xff]
    %v80 = vld [vmem:[#allocation5 + $0x28] sm:$0xff]
    %v81 = vld [vmem:[#allocation5 + $0x30] sm:$0xff]
    %v82 = vld [vmem:[#allocation5 + $0x38] sm:$0xff]
    %v83 = vld [vmem:[#allocation5 + $0x40] sm:$0xff]
    %v84 = vld [vmem:[#allocation5 + $0x48] sm:$0xff]
    %v85 = vld [vmem:[#allocation5 + $0x50] sm:$0xff]
    %v86 = vld [vmem:[#allocation5 + $0x58] sm:$0xff]
    %v87 = vld [vmem:[#allocation5 + $0x60] sm:$0xff]
    %v88 = vld [vmem:[#allocation5 + $0x68] sm:$0xff]
    %v89 = vld [vmem:[#allocation5 + $0x70] sm:$0xff]
    %v90 = vld [vmem:[#allocation5 + $0x78] sm:$0xff]
    %91 = vmatprep.subr.mxu0 0.0
    %92 = vmatpush1.msra.mxu0 %v75
    %93 = vmatprep.subr.mxu0 0.0
    %94 = vmatpush1.msra.mxu0 %v76
    %95 = vmatprep.subr.mxu0 0.0
    %96 = vmatpush1.msra.mxu0 %v77
    %97 = vmatprep.subr.mxu0 0.0
    %98 = vmatpush1.msra.mxu0 %v78
    %99 = vmatprep.subr.mxu0 0.0
    %100 = vmatpush1.msra.mxu0 %v79
    %101 = vmatprep.subr.mxu0 0.0
    %102 = vmatpush1.msra.mxu0 %v80
    %103 = vmatprep.subr.mxu0 0.0
    %104 = vmatpush1.msra.mxu0 %v81
    %105 = vmatprep.subr.mxu0 0.0
    %106 = vmatpush1.msra.mxu0 %v82
    %107 = vmatprep.subr.mxu0 0.0
    %108 = vmatpush1.msra.mxu0 %v83
    %109 = vmatprep.subr.mxu0 0.0
    %110 = vmatpush1.msra.mxu0 %v84
    %111 = vmatprep.subr.mxu0 0.0
    %112 = vmatpush1.msra.mxu0 %v85
    %113 = vmatprep.subr.mxu0 0.0
    %114 = vmatpush1.msra.mxu0 %v86
    %115 = vmatprep.subr.mxu0 0.0
    %116 = vmatpush1.msra.mxu0 %v87
    %117 = vmatprep.subr.mxu0 0.0
    %118 = vmatpush1.msra.mxu0 %v88
    %119 = vmatprep.subr.mxu0 0.0
    %120 = vmatpush1.msra.mxu0 %v89
    %121 = vmatprep.subr.mxu0 0.0
    %122 = vmatpush1.msra.mxu0 %v90
    %123 = vmatprep.subr.mxu0 0.0
    %124 = vmatpush1.msra.mxu0 0.0
    %125 = vmatprep.subr.mxu0 0.0
    %126 = vmatpush1.msra.mxu0 0.0
    %127 = vmatprep.subr.mxu0 0.0
    %128 = vmatpush1.msra.mxu0 0.0
    %129 = vmatprep.subr.mxu0 0.0
    %130 = vmatpush1.msra.mxu0 0.0
    %131 = vmatprep.subr.mxu0 0.0
    %132 = vmatpush1.msra.mxu0 0.0
    %133 = vmatprep.subr.mxu0 0.0
    %134 = vmatpush1.msra.mxu0 0.0
    %135 = vmatprep.subr.mxu0 0.0
    %136 = vmatpush1.msra.mxu0 0.0
    %137 = vmatprep.subr.mxu0 0.0
    %138 = vmatpush1.msra.mxu0 0.0
    %139 = vmatprep.subr.mxu0 0.0
    %140 = vmatpush1.msra.mxu0 0.0
    %141 = vmatprep.subr.mxu0 0.0
    %142 = vmatpush1.msra.mxu0 0.0
    %143 = vmatprep.subr.mxu0 0.0
    %144 = vmatpush1.msra.mxu0 0.0
    %145 = vmatprep.subr.mxu0 0.0
    %146 = vmatpush1.msra.mxu0 0.0
    %147 = vmatprep.subr.mxu0 0.0
    %148 = vmatpush1.msra.mxu0 0.0
    %149 = vmatprep.subr.mxu0 0.0
    %150 = vmatpush1.msra.mxu0 0.0
    %151 = vmatprep.subr.mxu0 0.0
    %152 = vmatpush1.msra.mxu0 0.0
    %153 = vmatprep.subr.mxu0 0.0
    %154 = vmatpush1.msra.mxu0 0.0
    %155 = vmatprep.mubr.f32.mxu0 0.0
    %156 = vmatmul.mubr.f32.gmra.mrb[0].mxu0 %v59
    %v157 = vpop.f32.mrb[0].mxu0
    %v158 = vadd.f32 0.0, %v157
    %v159 = vpop.f32.mrb[0].mxu0
    %160 = vmatprep.mubr.f32.mxu0 0.0
    %161 = vmatmul.mubr.f32.gmra.mrb[0].mxu0 %v60
    %v162 = vpop.f32.mrb[0].mxu0
    %v163 = vadd.f32 0.0, %v162
    %v164 = vpop.f32.mrb[0].mxu0
    %165 = vmatprep.mubr.f32.mxu0 0.0
    %166 = vmatmul.mubr.f32.gmra.mrb[0].mxu0 %v61
    %v167 = vpop.f32.mrb[0].mxu0
    %v168 = vadd.f32 0.0, %v167
    %v169 = vpop.f32.mrb[0].mxu0
    %170 = vmatprep.mubr.f32.mxu0 0.0
    %171 = vmatmul.mubr.f32.gmra.mrb[0].mxu0 %v62
    %v172 = vpop.f32.mrb[0].mxu0
    %v173 = vadd.f32 0.0, %v172
    %v174 = vpop.f32.mrb[0].mxu0
    %175 = vmatprep.mubr.f32.mxu0 0.0
    %176 = vmatmul.mubr.f32.gmra.mrb[0].mxu0 %v63
    %v177 = vpop.f32.mrb[0].mxu0
    %v178 = vadd.f32 0.0, %v177
    %v179 = vpop.f32.mrb[0].mxu0
    %180 = vmatprep.mubr.f32.mxu0 0.0
    %181 = vmatmul.mubr.f32.gmra.mrb[0].mxu0 %v64
    %v182 = vpop.f32.mrb[0].mxu0
    %v183 = vadd.f32 0.0, %v182
    %v184 = vpop.f32.mrb[0].mxu0
    %185 = vmatprep.mubr.f32.mxu0 0.0
    %186 = vmatmul.mubr.f32.gmra.mrb[0].mxu0 %v65
    %v187 = vpop.f32.mrb[0].mxu0
    %v188 = vadd.f32 0.0, %v187
    %v189 = vpop.f32.mrb[0].mxu0
    %190 = vmatprep.mubr.f32.mxu0 0.0
    %191 = vmatmul.mubr.f32.gmra.mrb[0].mxu0 %v66
    %v192 = vpop.f32.mrb[0].mxu0
    %v193 = vadd.f32 0.0, %v192
    %v194 = vpop.f32.mrb[0].mxu0
    %195 = vmatprep.mubr.f32.mxu0 0.0
    %196 = vmatmul.mubr.f32.gmra.mrb[0].mxu0 %v67
    %v197 = vpop.f32.mrb[0].mxu0
    %v198 = vadd.f32 0.0, %v197
    %v199 = vpop.f32.mrb[0].mxu0
    %200 = vmatprep.mubr.f32.mxu0 0.0
    %201 = vmatmul.mubr.f32.gmra.mrb[0].mxu0 %v68
    %v202 = vpop.f32.mrb[0].mxu0
    %v203 = vadd.f32 0.0, %v202
    %v204 = vpop.f32.mrb[0].mxu0
    %205 = vmatprep.mubr.f32.mxu0 0.0
    %206 = vmatmul.mubr.f32.gmra.mrb[0].mxu0 %v69
    %v207 = vpop.f32.mrb[0].mxu0
    %v208 = vadd.f32 0.0, %v207
    %v209 = vpop.f32.mrb[0].mxu0
    %210 = vmatprep.mubr.f32.mxu0 0.0
    %211 = vmatmul.mubr.f32.gmra.mrb[0].mxu0 %v70
    %v212 = vpop.f32.mrb[0].mxu0
    %v213 = vadd.f32 0.0, %v212
    %v214 = vpop.f32.mrb[0].mxu0
    %215 = vmatprep.mubr.f32.mxu0 0.0
    %216 = vmatmul.mubr.f32.gmra.mrb[0].mxu0 %v71
    %v217 = vpop.f32.mrb[0].mxu0
    %v218 = vadd.f32 0.0, %v217
    %v219 = vpop.f32.mrb[0].mxu0
    %220 = vmatprep.mubr.f32.mxu0 0.0
    %221 = vmatmul.mubr.f32.gmra.mrb[0].mxu0 %v72
    %v222 = vpop.f32.mrb[0].mxu0
    %v223 = vadd.f32 0.0, %v222
    %v224 = vpop.f32.mrb[0].mxu0
    %225 = vmatprep.mubr.f32.mxu0 0.0
    %226 = vmatmul.mubr.f32.gmra.mrb[0].mxu0 %v73
    %v227 = vpop.f32.mrb[0].mxu0
    %v228 = vadd.f32 0.0, %v227
    %v229 = vpop.f32.mrb[0].mxu0
    %230 = vmatprep.mubr.f32.mxu0 0.0
    %231 = vmatmul.mubr.f32.gmra.mrb[0].mxu0 %v74
    %v232 = vpop.f32.mrb[0].mxu0
    %v233 = vadd.f32 0.0, %v232
    %v234 = vpop.f32.mrb[0].mxu0
    %235 = vdwg.mxu0
    %v236 = vld [vmem:[#allocation7] sm:$0xff]
    %v237 = vld [vmem:[#allocation7 + $0x8] sm:$0xff]
    %v238 = vld [vmem:[#allocation7 + $0x10] sm:$0xff]
    %v239 = vld [vmem:[#allocation7 + $0x18] sm:$0xff]
    %v240 = vld [vmem:[#allocation7 + $0x20] sm:$0xff]
    %v241 = vld [vmem:[#allocation7 + $0x28] sm:$0xff]
    %v242 = vld [vmem:[#allocation7 + $0x30] sm:$0xff]
    %v243 = vld [vmem:[#allocation7 + $0x38] sm:$0xff]
    %v244 = vld [vmem:[#allocation7 + $0x40] sm:$0xff]
    %v245 = vld [vmem:[#allocation7 + $0x48] sm:$0xff]
    %v246 = vld [vmem:[#allocation7 + $0x50] sm:$0xff]
    %v247 = vld [vmem:[#allocation7 + $0x58] sm:$0xff]
    %v248 = vld [vmem:[#allocation7 + $0x60] sm:$0xff]
    %v249 = vld [vmem:[#allocation7 + $0x68] sm:$0xff]
    %v250 = vld [vmem:[#allocation7 + $0x70] sm:$0xff]
    %v251 = vld [vmem:[#allocation7 + $0x78] sm:$0xff]
    %v252 = vld [vmem:[%s3] sm:$0x1]
    %v254 = vlaneseq
    %v255 = vshrl.u32 %v254, 7
    %v256 = vsub.s32 0, %v255
    %v257 = vrot.slane %v252, %v256
    %259 = vmatprep.subr.mxu0 0.0
    %260 = vmatpush1.msra.mxu0 %v236
    %261 = vmatprep.subr.mxu0 0.0
    %262 = vmatpush1.msra.mxu0 %v237
    %263 = vmatprep.subr.mxu0 0.0
    %264 = vmatpush1.msra.mxu0 %v238
    %265 = vmatprep.subr.mxu0 0.0
    %266 = vmatpush1.msra.mxu0 %v239
    %267 = vmatprep.subr.mxu0 0.0
    %268 = vmatpush1.msra.mxu0 %v240
    %269 = vmatprep.subr.mxu0 0.0
    %270 = vmatpush1.msra.mxu0 %v241
    %271 = vmatprep.subr.mxu0 0.0
    %272 = vmatpush1.msra.mxu0 %v242
    %273 = vmatprep.subr.mxu0 0.0
    %274 = vmatpush1.msra.mxu0 %v243
    %275 = vmatprep.subr.mxu0 0.0
    %276 = vmatpush1.msra.mxu0 %v244
    %277 = vmatprep.subr.mxu0 0.0
    %278 = vmatpush1.msra.mxu0 %v245
    %279 = vmatprep.subr.mxu0 0.0
    %280 = vmatpush1.msra.mxu0 %v246
    %281 = vmatprep.subr.mxu0 0.0
    %282 = vmatpush1.msra.mxu0 %v247
    %283 = vmatprep.subr.mxu0 0.0
    %284 = vmatpush1.msra.mxu0 %v248
    %285 = vmatprep.subr.mxu0 0.0
    %286 = vmatpush1.msra.mxu0 %v249
    %287 = vmatprep.subr.mxu0 0.0
    %288 = vmatpush1.msra.mxu0 %v250
    %289 = vmatprep.subr.mxu0 0.0
    %290 = vmatpush1.msra.mxu0 %v251
    %291 = vmatprep.subr.mxu0 0.0
    %292 = vmatpush1.msra.mxu0 0.0
    %293 = vmatprep.subr.mxu0 0.0
    %294 = vmatpush1.msra.mxu0 0.0
    %295 = vmatprep.subr.mxu0 0.0
    %296 = vmatpush1.msra.mxu0 0.0
    %297 = vmatprep.subr.mxu0 0.0
    %298 = vmatpush1.msra.mxu0 0.0
    %299 = vmatprep.subr.mxu0 0.0
    %300 = vmatpush1.msra.mxu0 0.0
    %301 = vmatprep.subr.mxu0 0.0
    %302 = vmatpush1.msra.mxu0 0.0
    %303 = vmatprep.subr.mxu0 0.0
    %304 = vmatpush1.msra.mxu0 0.0
    %305 = vmatprep.subr.mxu0 0.0
    %306 = vmatpush1.msra.mxu0 0.0
    %307 = vmatprep.subr.mxu0 0.0
    %308 = vmatpush1.msra.mxu0 0.0
    %309 = vmatprep.subr.mxu0 0.0
    %310 = vmatpush1.msra.mxu0 0.0
    %311 = vmatprep.subr.mxu0 0.0
    %312 = vmatpush1.msra.mxu0 0.0
    %313 = vmatprep.subr.mxu0 0.0
    %314 = vmatpush1.msra.mxu0 0.0
    %315 = vmatprep.subr.mxu0 0.0
    %316 = vmatpush1.msra.mxu0 0.0
    %317 = vmatprep.subr.mxu0 0.0
    %318 = vmatpush1.msra.mxu0 0.0
    %319 = vmatprep.subr.mxu0 0.0
    %320 = vmatpush1.msra.mxu0 0.0
    %321 = vmatprep.subr.mxu0 0.0
    %322 = vmatpush1.msra.mxu0 0.0
    %323 = vmatprep.mubr.f32.mxu0 0.0
    %324 = vmatmul.mubr.f32.gmra.mrb[0].mxu0 %v158
    %v325 = vpop.f32.mrb[0].mxu0
    %v326 = vadd.f32 %v257, %v325
    %v327 = vpop.f32.mrb[0].mxu0
    %328 = vmatprep.mubr.f32.mxu0 0.0
    %329 = vmatmul.mubr.f32.gmra.mrb[0].mxu0 %v163
    %v330 = vpop.f32.mrb[0].mxu0
    %v331 = vadd.f32 %v257, %v330
    %v332 = vpop.f32.mrb[0].mxu0
    %333 = vmatprep.mubr.f32.mxu0 0.0
    %334 = vmatmul.mubr.f32.gmra.mrb[0].mxu0 %v168
    %v335 = vpop.f32.mrb[0].mxu0
    %v336 = vadd.f32 %v257, %v335
    %v337 = vpop.f32.mrb[0].mxu0
    %338 = vmatprep.mubr.f32.mxu0 0.0
    %339 = vmatmul.mubr.f32.gmra.mrb[0].mxu0 %v173
    %v340 = vpop.f32.mrb[0].mxu0
    %v341 = vadd.f32 %v257, %v340
    %v342 = vpop.f32.mrb[0].mxu0
    %343 = vmatprep.mubr.f32.mxu0 0.0
    %344 = vmatmul.mubr.f32.gmra.mrb[0].mxu0 %v178
    %v345 = vpop.f32.mrb[0].mxu0
    %v346 = vadd.f32 %v257, %v345
    %v347 = vpop.f32.mrb[0].mxu0
    %348 = vmatprep.mubr.f32.mxu0 0.0
    %349 = vmatmul.mubr.f32.gmra.mrb[0].mxu0 %v183
    %v350 = vpop.f32.mrb[0].mxu0
    %v351 = vadd.f32 %v257, %v350
    %v352 = vpop.f32.mrb[0].mxu0
    %353 = vmatprep.mubr.f32.mxu0 0.0
    %354 = vmatmul.mubr.f32.gmra.mrb[0].mxu0 %v188
    %v355 = vpop.f32.mrb[0].mxu0
    %v356 = vadd.f32 %v257, %v355
    %v357 = vpop.f32.mrb[0].mxu0
    %358 = vmatprep.mubr.f32.mxu0 0.0
    %359 = vmatmul.mubr.f32.gmra.mrb[0].mxu0 %v193
    %v360 = vpop.f32.mrb[0].mxu0
    %v361 = vadd.f32 %v257, %v360
    %v362 = vpop.f32.mrb[0].mxu0
    %363 = vmatprep.mubr.f32.mxu0 0.0
    %364 = vmatmul.mubr.f32.gmra.mrb[0].mxu0 %v198
    %v365 = vpop.f32.mrb[0].mxu0
    %v366 = vadd.f32 %v257, %v365
    %v367 = vpop.f32.mrb[0].mxu0
    %368 = vmatprep.mubr.f32.mxu0 0.0
    %369 = vmatmul.mubr.f32.gmra.mrb[0].mxu0 %v203
    %v370 = vpop.f32.mrb[0].mxu0
    %v371 = vadd.f32 %v257, %v370
    %v372 = vpop.f32.mrb[0].mxu0
    %373 = vmatprep.mubr.f32.mxu0 0.0
    %374 = vmatmul.mubr.f32.gmra.mrb[0].mxu0 %v208
    %v375 = vpop.f32.mrb[0].mxu0
    %v376 = vadd.f32 %v257, %v375
    %v377 = vpop.f32.mrb[0].mxu0
    %378 = vmatprep.mubr.f32.mxu0 0.0
    %379 = vmatmul.mubr.f32.gmra.mrb[0].mxu0 %v213
    %v380 = vpop.f32.mrb[0].mxu0
    %v381 = vadd.f32 %v257, %v380
    %v382 = vpop.f32.mrb[0].mxu0
    %383 = vmatprep.mubr.f32.mxu0 0.0
    %384 = vmatmul.mubr.f32.gmra.mrb[0].mxu0 %v218
    %v385 = vpop.f32.mrb[0].mxu0
    %v386 = vadd.f32 %v257, %v385
    %v387 = vpop.f32.mrb[0].mxu0
    %388 = vmatprep.mubr.f32.mxu0 0.0
    %389 = vmatmul.mubr.f32.gmra.mrb[0].mxu0 %v223
    %v390 = vpop.f32.mrb[0].mxu0
    %v391 = vadd.f32 %v257, %v390
    %v392 = vpop.f32.mrb[0].mxu0
    %393 = vmatprep.mubr.f32.mxu0 0.0
    %394 = vmatmul.mubr.f32.gmra.mrb[0].mxu0 %v228
    %v395 = vpop.f32.mrb[0].mxu0
    %v396 = vadd.f32 %v257, %v395
    %v397 = vpop.f32.mrb[0].mxu0
    %398 = vmatprep.mubr.f32.mxu0 0.0
    %399 = vmatmul.mubr.f32.gmra.mrb[0].mxu0 %v233
    %v400 = vpop.f32.mrb[0].mxu0
    %v401 = vadd.f32 %v257, %v400
    %v402 = vpop.f32.mrb[0].mxu0
    %403 = vdwg.mxu0
    %v404 = vtanh.pop %v326
    %v405 = vtanh.pop %v331
    %v406 = vtanh.pop %v336
    %v407 = vtanh.pop %v341
    %v408 = vtanh.pop %v346
    %v409 = vtanh.pop %v351
    %v410 = vtanh.pop %v356
    %v411 = vtanh.pop %v361
    %v412 = vtanh.pop %v366
    %v413 = vtanh.pop %v371
    %v414 = vtanh.pop %v376
    %v415 = vtanh.pop %v381
    %v416 = vtanh.pop %v386
    %v417 = vtanh.pop %v391
    %v418 = vtanh.pop %v396
    %v419 = vtanh.pop %v401
    %420 = vst [vmem:[#allocation8] sm:$0xff] %v404
    %421 = vst [vmem:[#allocation8 + $0x8] sm:$0xff] %v405
    %422 = vst [vmem:[#allocation8 + $0x10] sm:$0xff] %v406
    %423 = vst [vmem:[#allocation8 + $0x18] sm:$0xff] %v407
    %424 = vst [vmem:[#allocation8 + $0x20] sm:$0xff] %v408
    %425 = vst [vmem:[#allocation8 + $0x28] sm:$0xff] %v409
    %426 = vst [vmem:[#allocation8 + $0x30] sm:$0xff] %v410
    %427 = vst [vmem:[#allocation8 + $0x38] sm:$0xff] %v411
    %428 = vst [vmem:[#allocation8 + $0x40] sm:$0xff] %v412
    %429 = vst [vmem:[#allocation8 + $0x48] sm:$0xff] %v413
    %430 = vst [vmem:[#allocation8 + $0x50] sm:$0xff] %v414
    %431 = vst [vmem:[#allocation8 + $0x58] sm:$0xff] %v415
    %432 = vst [vmem:[#allocation8 + $0x60] sm:$0xff] %v416
    %433 = vst [vmem:[#allocation8 + $0x68] sm:$0xff] %v417
    %434 = vst [vmem:[#allocation8 + $0x70] sm:$0xff] %v418
    %435 = vst [vmem:[#allocation8 + $0x78] sm:$0xff] %v419
    // Predicated region
    $region30: #{tpu_custom_call.1} parent=1 // pred_check
      _
    $region31: #{tpu_custom_call.1} parent=1 // pred_check_branch
      %437 = sbr.rel (0) target = $region33
    $region32: #{tpu_custom_call.1} parent=1 // pred_region
      %s439 = ssub.s32 2048, 2048
      %440 = vsyncadd [#allocation4], %s439
      %s441 = sshll.u32 [#allocation8], 4
      %s442 = int_to_ptr.vmem [resolvable:$true] %s441
      %447 = dma.vmem_to_hbm [thread:$0]  %s442, 2048, %s4, [#allocation4], 128, 128, 8
    $region33: #{tpu_custom_call.1} parent=1 // pred_fallthru
      _
    // Predicated region
    $region34: #{tpu_custom_call.1} parent=1 // pred_check
      _
    $region35: #{tpu_custom_call.1} parent=1 // pred_check_branch
      %449 = sbr.rel (0) target = $region37
    $region36: #{tpu_custom_call.1} parent=1 // pred_region
      %450 = dma.done [#allocation4], 2048
    $region37: #{tpu_custom_call.1} parent=1 // pred_fallthru
      _
    %451 = vsyncpa [#allocation3], 1
    %452 = vsyncpa [#allocation6], 1
    %453 = vsyncpa [#allocation4], 1

</llo_original>
